<compile_context>
chip_gen: v5e
topology: v5e:2x2
jax: 0.10.0
libtpu: 0.0.40
codegen_flags: <defaults>
</compile_context>

<pallas_src>
import functools

import jax
import jax.numpy as jnp
from jax import lax
from jax.experimental import pallas as pl
from jax.experimental.pallas import tpu as pltpu


def _mlm_loss_kernel(logits_ref, tgt_ref, msk_ref, sum_ref, cnt_ref, *, pad_token):
    # Zero the per-slice accumulators on the first reduction step.
    @pl.when(pl.program_id(1) == 0)
    def _init():
        sum_ref[...] = jnp.zeros_like(sum_ref)
        cnt_ref[...] = jnp.zeros_like(cnt_ref)

    logits = logits_ref[...].astype(jnp.float32)      # [TN, V] (cast per-tile)
    tgt = tgt_ref[...]                                # [TN, 1] int32
    msk = msk_ref[...]                                # [TN, 1] int32

    # Numerically stable cross-entropy; `shifted` is reused for both the
    # exp-sum and the target gather so the [TN, V] tile is touched once.
    row_max = jnp.max(logits, axis=-1, keepdims=True)             # [TN, 1]
    shifted = logits - row_max                                    # [TN, V]
    sumexp = jnp.sum(jnp.exp(shifted), axis=-1, keepdims=True)    # [TN, 1]

    vocab_iota = lax.broadcasted_iota(jnp.int32, shifted.shape, 1)
    tgt_shifted = jnp.sum(jnp.where(vocab_iota == tgt, shifted, 0.0),
                          axis=-1, keepdims=True)                 # [TN, 1]

    # counted = masked AND not the ignore_index class.  Rows whose logits were
    # never really loaded (ragged tail / duplicated out-of-range tiles) always
    # have msk == 0, so any garbage values are discarded by the jnp.where.
    counted = jnp.logical_and(msk != 0, tgt != pad_token)         # [TN, 1]
    per_row = jnp.where(counted, jnp.log(sumexp) - tgt_shifted, 0.0)

    sum_ref[...] += jnp.sum(per_row)
    cnt_ref[...] += jnp.sum(counted.astype(jnp.float32))


def _pick_tile_n(n_rows, row_bytes, target_block_bytes=2 * 1024 * 1024):
    """Pick tile_n so a logits block is ~2 MiB (multiple of 8, >= 8)."""
    t = max(8, min(4096, target_block_bytes // max(1, row_bytes)))
    t = (t // 8) * 8
    n_rounded = ((n_rows + 7) // 8) * 8
    return max(8, min(t, n_rounded))


def unimol_mlm_loss(inputs, target, mask_mask, pad_token, *,
                    tile_n=None, max_parallel=8):
    """inputs: [L, B, V] float; target: [B, L] int; mask_mask: [B, L] bool."""
    L, B, V = inputs.shape
    N = L * B

    # Free, contiguous flatten of the logits: row r = l * B + b (L-major).
    # Transpose only the tiny per-token arrays to match that row order.
    x = inputs.reshape(N, V)                              # no transpose, no upcast
    tgt = jnp.transpose(target).reshape(N).astype(jnp.int32)
    msk = jnp.transpose(mask_mask).reshape(N).astype(jnp.int32)

    if tile_n is None:
        tile_n = _pick_tile_n(N, V * x.dtype.itemsize)
    num_tiles = pl.cdiv(N, tile_n)

    # Outer "parallel" axis (second TensorCore on v7x), inner reduction axis.
    p_slices = max(1, min(max_parallel, num_tiles))
    steps = pl.cdiv(num_tiles, p_slices)
    n_total = p_slices * steps * tile_n

    # Only the tiny per-row arrays get padded (pad rows have msk == 0); the
    # big [N, V] logits tensor is consumed as-is.
    pad = n_total - N
    if pad:
        tgt = jnp.pad(tgt, (0, pad), constant_values=pad_token)
        msk = jnp.pad(msk, (0, pad), constant_values=0)
    tgt = tgt.reshape(n_total, 1)
    msk = msk.reshape(n_total, 1)

    last_block = num_tiles - 1

    def logits_map(p, s):
        # Clamp so the DMA never starts past the last (possibly ragged) tile;
        # clamped duplicate tiles contribute nothing because their msk rows
        # (taken from the unclamped, padded tgt/msk blocks) are all zero.
        return (jnp.minimum(p * steps + s, last_block), 0)

    def small_map(p, s):
        return (p * steps + s, 0)

    block_bytes = tile_n * V * x.dtype.itemsize
    vmem_limit = int(min(96 * 1024 * 1024,
                         max(32 * 1024 * 1024, 4 * block_bytes)))

    kernel = functools.partial(_mlm_loss_kernel, pad_token=pad_token)
    sum_parts, cnt_parts = pl.pallas_call(
        kernel,
        out_shape=(
            jax.ShapeDtypeStruct((p_slices, 1), jnp.float32),
            jax.ShapeDtypeStruct((p_slices, 1), jnp.float32),
        ),
        grid_spec=pltpu.PrefetchScalarGridSpec(
            num_scalar_prefetch=0,
            grid=(p_slices, steps),
            in_specs=[
                pl.BlockSpec((tile_n, V), logits_map),
                pl.BlockSpec((tile_n, 1), small_map),
                pl.BlockSpec((tile_n, 1), small_map),
            ],
            out_specs=[
                pl.BlockSpec((1, 1), lambda p, s: (p, 0)),
                pl.BlockSpec((1, 1), lambda p, s: (p, 0)),
            ],
        ),
        compiler_params=pltpu.CompilerParams(
            dimension_semantics=("parallel", "arbitrary"),
            vmem_limit_bytes=vmem_limit,
        ),
    )(x, tgt, msk)

    # reduction='mean' over counted tokens (NaN if count == 0, matching torch).
    return jnp.sum(sum_parts) / jnp.sum(cnt_parts)


def _reference_loss(inputs, target, mask_mask, pad_token):
    """Pure-JAX reference mirroring F.cross_entropy(ignore_index, mean)."""
    x = jnp.transpose(inputs, (1, 0, 2)).astype(jnp.float32)   # [B, L, V]
    logp = jax.nn.log_softmax(x, axis=-1)
    nll = -jnp.take_along_axis(logp, target[..., None].astype(jnp.int32),
                               axis=-1)[..., 0]                # [B, L]
    w = jnp.logical_and(mask_mask, target != pad_token).astype(jnp.float32)
    return jnp.sum(nll * w) / jnp.sum(w)


if __name__ == "__main__":
    key = jax.random.PRNGKey(0)

    # --- Test 1: module-sized shapes, auto tile size, f32 logits -----------
    L, B, V = 8, 2, 32
    PAD = 0
    k_in, k_tgt, k_msk, key = jax.random.split(key, 4)
    inputs = jax.random.normal(k_in, (L, B, V), dtype=jnp.float32)
    target = jax.random.randint(k_tgt, (B, L), 0, V, dtype=jnp.int32)
    mask_mask = jax.random.bernoulli(k_msk, 0.5, (B, L))
    # Guarantee at least one counted (masked, non-pad) token deterministically.
    target = target.at[0, 0].set(1)
    mask_mask = mask_mask.at[0, 0].set(True)

    loss = jax.block_until_ready(unimol_mlm_loss(inputs, target, mask_mask, PAD))
    ref = _reference_loss(inputs, target, mask_mask, PAD)
    assert jnp.allclose(loss, ref, rtol=1e-5, atol=1e-5), (loss, ref)

    # --- Test 2: bf16 logits, forced small tile -> multi-tile 2-D grid with
    # a ragged last tile, padded msk rows and clamped out-of-range steps. ---
    L2, B2, V2, PAD2 = 47, 3, 160, 3
    k_in2, k_tgt2, k_msk2, _ = jax.random.split(key, 4)
    inputs2 = jax.random.normal(k_in2, (L2, B2, V2), dtype=jnp.bfloat16)
    target2 = jax.random.randint(k_tgt2, (B2, L2), 0, V2, dtype=jnp.int32)
    mask2 = jax.random.bernoulli(k_msk2, 0.4, (B2, L2))
    target2 = target2.at[0, 0].set(7)
    mask2 = mask2.at[0, 0].set(True)

    loss2 = jax.block_until_ready(
        unimol_mlm_loss(inputs2, target2, mask2, PAD2, tile_n=16))
    ref2 = _reference_loss(inputs2, target2, mask2, PAD2)
    assert jnp.allclose(loss2, ref2, rtol=1e-4, atol=1e-4), (loss2, ref2)

    print("KERNEL_OK")
</pallas_src>

<mosaic_0001>
module attributes {stable_mosaic.version = 11 : i64} {
  func.func @_mlm_loss_kernel(%arg0: i32, %arg1: i32, %arg2: memref<16x32xf32, #tpu.memory_space<vmem>>, %arg3: memref<16x1xi32, #tpu.memory_space<vmem>>, %arg4: memref<16x1xi32, #tpu.memory_space<vmem>>, %arg5: memref<1x1xf32, #tpu.memory_space<vmem>>, %arg6: memref<1x1xf32, #tpu.memory_space<vmem>>) attributes {dimension_semantics = [#tpu.dimension_semantics<parallel>, #tpu.dimension_semantics<arbitrary>], iteration_bounds = array<i64: 1, 1>, scalar_prefetch = 0 : i64, scratch_operands = 0 : i64, tpu.core_type = #tpu.core_type<tc>, window_params = [{transform_indices = @transform_0, window_bounds = array<i64: 16, 32>}, {transform_indices = @transform_1, window_bounds = array<i64: 16, 1>}, {transform_indices = @transform_2, window_bounds = array<i64: 16, 1>}, {transform_indices = @transform_3, window_bounds = array<i64: 1, 1>}, {transform_indices = @transform_4, window_bounds = array<i64: 1, 1>}]} {
    %c0_i32 = arith.constant 0 : i32
    %0 = arith.cmpi eq, %arg1, %c0_i32 : i32
    %1 = arith.extui %0 : i1 to i32
    %c0_i32_0 = arith.constant 0 : i32
    %2 = arith.cmpi ne, %1, %c0_i32_0 : i32
    scf.if %2 {
      %cst_22 = arith.constant 0.000000e+00 : f32
      %47 = vector.broadcast %cst_22 : f32 to vector<1x1xf32>
      %c0_23 = arith.constant 0 : index
      %c0_24 = arith.constant 0 : index
      %48 = vector.load %arg5[%c0_23, %c0_24] : memref<1x1xf32, #tpu.memory_space<vmem>>, vector<1x1xf32>
      tpu.vector_store %arg5[%c0_23, %c0_24], %47 {strides = array<i32>} : memref<1x1xf32, #tpu.memory_space<vmem>>, vector<1x1xf32>,
      %cst_25 = arith.constant 0.000000e+00 : f32
      %49 = vector.broadcast %cst_25 : f32 to vector<1x1xf32>
      %c0_26 = arith.constant 0 : index
      %c0_27 = arith.constant 0 : index
      %50 = vector.load %arg6[%c0_26, %c0_27] : memref<1x1xf32, #tpu.memory_space<vmem>>, vector<1x1xf32>
      tpu.vector_store %arg6[%c0_26, %c0_27], %49 {strides = array<i32>} : memref<1x1xf32, #tpu.memory_space<vmem>>, vector<1x1xf32>,
    } else {
    }
    %c0 = arith.constant 0 : index
    %c0_1 = arith.constant 0 : index
    %3 = vector.load %arg2[%c0, %c0_1] : memref<16x32xf32, #tpu.memory_space<vmem>>, vector<16x32xf32>
    %c0_2 = arith.constant 0 : index
    %c0_3 = arith.constant 0 : index
    %4 = vector.load %arg3[%c0_2, %c0_3] : memref<16x1xi32, #tpu.memory_space<vmem>>, vector<16x1xi32>
    %c0_4 = arith.constant 0 : index
    %c0_5 = arith.constant 0 : index
    %5 = vector.load %arg4[%c0_4, %c0_5] : memref<16x1xi32, #tpu.memory_space<vmem>>, vector<16x1xi32>
    %cst = arith.constant dense<0xFF800000> : vector<16xf32>
    %6 = vector.multi_reduction <maximumf>, %3, %cst [1] : vector<16x32xf32> to vector<16xf32>
    %7 = vector.shape_cast %6 : vector<16xf32> to vector<16x1xf32>
    %8 = vector.broadcast %7 : vector<16x1xf32> to vector<16x32xf32>
    %9 = arith.subf %3, %8 : vector<16x32xf32>
    %10 = math.exp %9 : vector<16x32xf32>
    %cst_6 = arith.constant dense<0.000000e+00> : vector<16xf32>
    %11 = vector.multi_reduction <add>, %10, %cst_6 [1] : vector<16x32xf32> to vector<16xf32>
    %12 = vector.shape_cast %11 : vector<16xf32> to vector<16x1xf32>
    %13 = tpu.iota {dimensions = array<i32: 1>} : vector<16x32xi32>
    %14 = vector.broadcast %4 : vector<16x1xi32> to vector<16x32xi32>
    %15 = arith.cmpi eq, %13, %14 : vector<16x32xi32>
    %cst_7 = arith.constant 0.000000e+00 : f32
    %16 = vector.broadcast %cst_7 : f32 to vector<16x32xf32>
    %17 = arith.select %15, %9, %16 : vector<16x32xi1>, vector<16x32xf32>
    %cst_8 = arith.constant dense<0.000000e+00> : vector<16xf32>
    %18 = vector.multi_reduction <add>, %17, %cst_8 [1] : vector<16x32xf32> to vector<16xf32>
    %19 = vector.shape_cast %18 : vector<16xf32> to vector<16x1xf32>
    %c0_i32_9 = arith.constant 0 : i32
    %20 = vector.broadcast %c0_i32_9 : i32 to vector<16x1xi32>
    %21 = arith.cmpi ne, %5, %20 : vector<16x1xi32>
    %c0_i32_10 = arith.constant 0 : i32
    %22 = vector.broadcast %c0_i32_10 : i32 to vector<16x1xi32>
    %23 = arith.cmpi ne, %4, %22 : vector<16x1xi32>
    %24 = arith.andi %21, %23 : vector<16x1xi1>
    %25 = math.log %12 : vector<16x1xf32>
    %26 = arith.subf %25, %19 : vector<16x1xf32>
    %cst_11 = arith.constant 0.000000e+00 : f32
    %27 = vector.broadcast %cst_11 : f32 to vector<16x1xf32>
    %28 = arith.select %24, %26, %27 : vector<16x1xi1>, vector<16x1xf32>
    %c0_12 = arith.constant 0 : index
    %c0_13 = arith.constant 0 : index
    %29 = vector.load %arg5[%c0_12, %c0_13] : memref<1x1xf32, #tpu.memory_space<vmem>>, vector<1x1xf32>
    %30 = vector.shape_cast %28 : vector<16x1xf32> to vector<1x16x1xf32>
    %cst_14 = arith.constant dense<0.000000e+00> : vector<1xf32>
    %31 = vector.multi_reduction <add>, %30, %cst_14 [1, 2] : vector<1x16x1xf32> to vector<1xf32>
    %32 = vector.shape_cast %31 : vector<1xf32> to vector<1x1x1xf32>
    %33 = vector.extract %32[0, 0, 0] : f32 from vector<1x1x1xf32>
    %34 = vector.broadcast %33 : f32 to vector<1x1xf32>
    %35 = arith.addf %29, %34 : vector<1x1xf32>
    %c0_15 = arith.constant 0 : index
    %c0_16 = arith.constant 0 : index
    %36 = vector.load %arg5[%c0_15, %c0_16] : memref<1x1xf32, #tpu.memory_space<vmem>>, vector<1x1xf32>
    tpu.vector_store %arg5[%c0_15, %c0_16], %35 {strides = array<i32>} : memref<1x1xf32, #tpu.memory_space<vmem>>, vector<1x1xf32>,
    %c0_17 = arith.constant 0 : index
    %c0_18 = arith.constant 0 : index
    %37 = vector.load %arg6[%c0_17, %c0_18] : memref<1x1xf32, #tpu.memory_space<vmem>>, vector<1x1xf32>
    %38 = arith.extui %24 : vector<16x1xi1> to vector<16x1xi32>
    %39 = arith.sitofp %38 : vector<16x1xi32> to vector<16x1xf32>
    %40 = vector.shape_cast %39 : vector<16x1xf32> to vector<1x16x1xf32>
    %cst_19 = arith.constant dense<0.000000e+00> : vector<1xf32>
    %41 = vector.multi_reduction <add>, %40, %cst_19 [1, 2] : vector<1x16x1xf32> to vector<1xf32>
    %42 = vector.shape_cast %41 : vector<1xf32> to vector<1x1x1xf32>
    %43 = vector.extract %42[0, 0, 0] : f32 from vector<1x1x1xf32>
    %44 = vector.broadcast %43 : f32 to vector<1x1xf32>
    %45 = arith.addf %37, %44 : vector<1x1xf32>
    %c0_20 = arith.constant 0 : index
    %c0_21 = arith.constant 0 : index
    %46 = vector.load %arg6[%c0_20, %c0_21] : memref<1x1xf32, #tpu.memory_space<vmem>>, vector<1x1xf32>
    tpu.vector_store %arg6[%c0_20, %c0_21], %45 {strides = array<i32>} : memref<1x1xf32, #tpu.memory_space<vmem>>, vector<1x1xf32>,
    return
  }
  func.func @transform_0(%arg0: i32, %arg1: i32) -> (i32, i32) {
    %c1_i32 = arith.constant 1 : i32
    %0 = arith.muli %arg0, %c1_i32 : i32
    %1 = arith.addi %0, %arg1 : i32
    %c0_i32 = arith.constant 0 : i32
    %2 = arith.minsi %1, %c0_i32 : i32
    %c0_i32_0 = arith.constant 0 : i32
    %c0_i32_1 = arith.constant 0 : i32
    return %2, %c0_i32_0 : i32, i32
  }
  func.func @transform_1(%arg0: i32, %arg1: i32) -> (i32, i32) {
    %c1_i32 = arith.constant 1 : i32
    %0 = arith.muli %arg0, %c1_i32 : i32
    %1 = arith.addi %0, %arg1 : i32
    %c0_i32 = arith.constant 0 : i32
    %c0_i32_0 = arith.constant 0 : i32
    return %1, %c0_i32 : i32, i32
  }
  func.func @transform_2(%arg0: i32, %arg1: i32) -> (i32, i32) {
    %c1_i32 = arith.constant 1 : i32
    %0 = arith.muli %arg0, %c1_i32 : i32
    %1 = arith.addi %0, %arg1 : i32
    %c0_i32 = arith.constant 0 : i32
    %c0_i32_0 = arith.constant 0 : i32
    return %1, %c0_i32 : i32, i32
  }
  func.func @transform_3(%arg0: i32, %arg1: i32) -> (i32, i32) {
    %c0_i32 = arith.constant 0 : i32
    %c0_i32_0 = arith.constant 0 : i32
    return %arg0, %c0_i32 : i32, i32
  }
  func.func @transform_4(%arg0: i32, %arg1: i32) -> (i32, i32) {
    %c0_i32 = arith.constant 0 : i32
    %c0_i32_0 = arith.constant 0 : i32
    return %arg0, %c0_i32 : i32, i32
  }
}

</mosaic_0001>

<llo_original>
// kernel: tpu_custom_call.1
$region0: #{tpu_custom_call.1}
  #allocation0 [shape = 'u32[]', space=smem, size = 0x4, offset = 0x4, fixed_abs, tag = 'smem constant byte address 0x4 - core index']
  #allocation1 [shape = 'u32[72,128]{1,0:T(1,128)}', space=vmem, size = 0x9000, scoped, tag = 'internal scratch']
  %s0 = inlined_call_operand.vmem [shape: f32[16,32], index: 0, kind: input, shape index: {}]
  %s1 = inlined_call_operand.vmem [shape: s32[16,1], index: 1, kind: input, shape index: {}]
  %s2 = inlined_call_operand.vmem [shape: s32[16,1], index: 2, kind: input, shape index: {}]
  %s3 = inlined_call_operand.hbm [shape: f32[1,1], index: 3, kind: output, shape index: {0}]
  %s4 = inlined_call_operand.hbm [shape: f32[1,1], index: 4, kind: output, shape index: {1}]
  %5 = xla_tuple %s3, %s4
  %s6 = sld [smem:[#allocation0]]
  $region34: #{tpu_custom_call.1} parent=0
    _
  %s8 = ssub.s32 1, %s6
  %s9 = scalar_select 0, %s8, %s6
  $region1: #{tpu_custom_call.1} parent=0
    #allocation2 [shape = 'u8[512]{0}', space=vmem, size = 0x400, scoped, tag = 'output window, operand 0, single buffered']
    #allocation3 [shape = 's32[1]{0}', space=sflag, size = 0x4, scoped, tag = 'scoped memory for tpu_custom_call.1']
    #allocation4 [shape = 'u8[512]{0}', space=vmem, size = 0x400, scoped, tag = 'output window, operand 1, single buffered']
    #allocation5 [shape = 's32[1]{0}', space=sflag, size = 0x4, scoped, tag = 'scoped memory for tpu_custom_call.1']
    %10 = vsyncpa [#allocation3], 0
    %11 = vsyncpa [#allocation5], 0
    // Predicated region
    $region2: #{tpu_custom_call.1} parent=1 // pred_check
      _
    $region3: #{tpu_custom_call.1} parent=1 // pred_check_branch
      %13 = sbr.rel (0) target = $region5
    $region4: #{tpu_custom_call.1} parent=1 // pred_region
      %s14 = sadd.s32 0, 0
      %p15 = scmp.lt.s32.totalorder %s14, 0
      %s16 = scalar_select %p15, %s14, 0
      %s17 = smul.u32 2, %s16
      %p18 = scmp.lt.s32.totalorder %s17, 1
      %s19 = scalar_select %p18, %s17, 1
      %s20 = smul.addr %s19, 8
      %s21 = scalar_lea.vmem %s0, %s20
      %s22 = sadd.s32 0, 0
      %p23 = scmp.lt.s32.totalorder %s22, 0
      %s24 = scalar_select %p23, %s22, 0
      %s25 = smul.u32 2, %s24
    $region5: #{tpu_custom_call.1} parent=1 // pred_fallthru
      _
    // Predicated region
    $region6: #{tpu_custom_call.1} parent=1 // pred_check
      _
    $region7: #{tpu_custom_call.1} parent=1 // pred_check_branch
      %27 = sbr.rel (0) target = $region9
    $region8: #{tpu_custom_call.1} parent=1 // pred_region
      %s28 = sadd.s32 0, 0
      %s29 = smul.u32 2, %s28
      %p30 = scmp.lt.s32.totalorder %s29, 1
      %s31 = scalar_select %p30, %s29, 1
      %s32 = smul.addr %s31, 8
      %s33 = scalar_lea.vmem %s1, %s32
      %s34 = sadd.s32 0, 0
      %s35 = smul.u32 2, %s34
    $region9: #{tpu_custom_call.1} parent=1 // pred_fallthru
      _
    // Predicated region
    $region10: #{tpu_custom_call.1} parent=1 // pred_check
      _
    $region11: #{tpu_custom_call.1} parent=1 // pred_check_branch
      %37 = sbr.rel (0) target = $region13
    $region12: #{tpu_custom_call.1} parent=1 // pred_region
      %s38 = sadd.s32 0, 0
      %s39 = smul.u32 2, %s38
      %p40 = scmp.lt.s32.totalorder %s39, 1
      %s41 = scalar_select %p40, %s39, 1
      %s42 = smul.addr %s41, 8
      %s43 = scalar_lea.vmem %s2, %s42
      %s44 = sadd.s32 0, 0
      %s45 = smul.u32 2, %s44
    $region13: #{tpu_custom_call.1} parent=1 // pred_fallthru
      _
    %s46 = sadd.s32 0, 0
    %p47 = scmp.lt.s32.totalorder %s46, 0
    %s48 = scalar_select %p47, %s46, 0
    %s49 = smul.u32 2, %s48
    %p50 = scmp.lt.s32.totalorder %s49, 1
    %s51 = scalar_select %p50, %s49, 1
    %s52 = smul.addr %s51, 8
    %s53 = scalar_lea.vmem %s0, %s52
    %s54 = sadd.s32 0, 0
    %s55 = smul.u32 2, %s54
    %p56 = scmp.lt.s32.totalorder %s55, 1
    %s57 = scalar_select %p56, %s55, 1
    %s58 = smul.addr %s57, 8
    %s59 = scalar_lea.vmem %s1, %s58
    %s60 = sadd.s32 0, 0
    %s61 = smul.u32 2, %s60
    %p62 = scmp.lt.s32.totalorder %s61, 1
    %s63 = scalar_select %p62, %s61, 1
    %s64 = smul.addr %s63, 8
    %s65 = scalar_lea.vmem %s2, %s64
    %s66 = sadd.s32 0, 0
    %p67 = scmp.lt.s32.totalorder %s66, 0
    %s68 = scalar_select %p67, %s66, 0
    %s69 = smul.u32 2, %s68
    %p70 = scmp.lt.s32.totalorder %s69, 1
    %s71 = scalar_select %p70, %s69, 1
    %s72 = smul.addr %s71, 8
    %s73 = scalar_lea.vmem %s0, %s72
    %s74 = sadd.s32 0, 0
    %p75 = scmp.lt.s32.totalorder %s74, 0
    %s76 = scalar_select %p75, %s74, 0
    %s77 = smul.u32 2, %s76
    %s78 = sadd.s32 0, 0
    %s79 = smul.u32 2, %s78
    %p80 = scmp.lt.s32.totalorder %s79, 1
    %s81 = scalar_select %p80, %s79, 1
    %s82 = smul.addr %s81, 8
    %s83 = scalar_lea.vmem %s1, %s82
    %s84 = sadd.s32 0, 0
    %s85 = smul.u32 2, %s84
    %s86 = sadd.s32 0, 0
    %s87 = smul.u32 2, %s86
    %p88 = scmp.lt.s32.totalorder %s87, 1
    %s89 = scalar_select %p88, %s87, 1
    %s90 = smul.addr %s89, 8
    %s91 = scalar_lea.vmem %s2, %s90
    %s92 = sadd.s32 0, 0
    %s93 = smul.u32 2, %s92
    %p94 = scmp.eq.s32.totalorder 0, 0
    // Predicated region
    $region14: #{tpu_custom_call.1} parent=1 // pred_check
      %p95 = pneg %p94
    $region15: #{tpu_custom_call.1} parent=1 // pred_check_branch
      %97 = sbr.rel (%p95) target = $region17
    $region16: #{tpu_custom_call.1} parent=1 // pred_region
      %vm98 = vcmask 0
      %99 = vst.msk [vmem:[#allocation2] sm:$0x1] %vm98, 0.0
      %100 = vst.msk [vmem:[#allocation4] sm:$0x1] %vm98, 0.0
    $region17: #{tpu_custom_call.1} parent=1 // pred_fallthru
      _
    %v101 = vld [vmem:[%s73] sm:$0xff]
    %v102 = vld [vmem:[%s73 + $0x8] sm:$0xff]
    %v103 = vld [vmem:[%s83] sm:$0xff]
    %v104 = vld [vmem:[%s83 + $0x8] sm:$0xff]
    %v105 = vld [vmem:[%s91] sm:$0xff]
    %v106 = vld [vmem:[%s91 + $0x8] sm:$0xff]
    %vm107 = vcmask 261120
    %v108 = vsel %vm107, %v101, -inf
    %109 = vmax.xlane.f32.xlu0 %v108
    %v110 = vpop.xlane.xlu0 %109
    %v111 = vsel %vm107, %v102, -inf
    %112 = vmax.xlane.f32.xlu0 %v111
    %v113 = vpop.xlane.xlu0 %112
    %v114 = vsub.f32 %v101, %v110
    %v115 = vsub.f32 %v102, %v113
    %v116 = vmul.f32 %v114, 1.442695
    %v117 = vpow.pop %v116
    %v118 = vmul.f32 %v115, 1.442695
    %v119 = vpow.pop %v118
    %v120 = vsel %vm107, %v117, 0.0
    %121 = vadd.xlane.f32.xlu0 %v120
    %v122 = vpop.xlane.xlu0 %121
    %v123 = vsel %vm107, %v119, 0.0
    %124 = vadd.xlane.f32.xlu0 %v123
    %v125 = vpop.xlane.xlu0 %124
    %v126 = vlaneseq
    %v127 = vand.u32 %v126, 127
    %128 = vset.pattern.permute.xlu0 0
    %129 = vperm.xlu0 %128, %v103
    %v130 = vpop.permute.xlu0 %129
    %131 = vset.pattern.permute.xlu0 0
    %132 = vperm.xlu0 %131, %v104
    %v133 = vpop.permute.xlu0 %132
    %vm134 = vcmp.eq.s32.totalorder %v127, %v130
    %vm135 = vcmp.eq.s32.totalorder %v127, %v133
    %v136 = vsel %vm134, %v114, 0.0
    %v137 = vsel %vm135, %v115, 0.0
    %v138 = vsel %vm107, %v136, 0.0
    %139 = vadd.xlane.f32.xlu0 %v138
    %v140 = vpop.xlane.xlu0 %139
    %v141 = vsel %vm107, %v137, 0.0
    %142 = vadd.xlane.f32.xlu0 %v141
    %v143 = vpop.xlane.xlu0 %142
    %vm144 = vcmp.ne.s32.totalorder %v105, 0
    %vm145 = vcmp.ne.s32.totalorder %v106, 0
    %vm146 = vcmp.ne.s32.totalorder %v103, 0
    %vm147 = vcmp.ne.s32.totalorder %v104, 0
    %vm148 = vmand %vm144, %vm146
    %vm149 = vmand %vm145, %vm147
    %v150 = vlog2.pop %v122
    %v151 = vmul.f32 %v150, 0.6931472
    %v152 = vlog2.pop %v125
    %v153 = vmul.f32 %v152, 0.6931472
    %v154 = vsub.f32 %v151, %v140
    %v155 = vsub.f32 %v153, %v143
    %v156 = vsel %vm148, %v154, 0.0
    %v157 = vsel %vm149, %v155, 0.0
    %v158 = vld [vmem:[#allocation2] sm:$0x1]
    %vm159 = vcmask 7168
    %v160 = vsel %vm159, %v156, 0.0
    %v161 = vsel %vm159, %v157, 0.0
    %v162 = vadd.f32 %v160, %v161
    %163 = vadd.xlane.f32.xlu0 %v162
    %v164 = vpop.xlane.xlu0 %163
    %v165 = vrot.slane %v164, 4
    %v166 = vadd.f32 %v164, %v165
    %v167 = vrot.slane %v166, 2
    %v168 = vadd.f32 %v166, %v167
    %v169 = vrot.slane %v168, 1
    %v170 = vadd.f32 %v168, %v169
    %s171 = vtos %v170
    %v172 = vstv %s171
    %v173 = vadd.f32 %v158, %v172
    %vm174 = vcmask 0
    %175 = vst.msk [vmem:[#allocation2] sm:$0x1] %vm174, %v173
    %v176 = vld [vmem:[#allocation4] sm:$0x1]
    %v177 = vsel %vm148, 1, 0
    %v178 = vsel %vm149, 1, 0
    %v179 = vcvt.s32.f32 %v177
    %v180 = vcvt.s32.f32 %v178
    %v181 = vsel %vm159, %v179, 0.0
    %v182 = vsel %vm159, %v180, 0.0
    %v183 = vadd.f32 %v181, %v182
    %184 = vadd.xlane.f32.xlu0 %v183
    %v185 = vpop.xlane.xlu0 %184
    %v186 = vrot.slane %v185, 4
    %v187 = vadd.f32 %v185, %v186
    %v188 = vrot.slane %v187, 2
    %v189 = vadd.f32 %v187, %v188
    %v190 = vrot.slane %v189, 1
    %v191 = vadd.f32 %v189, %v190
    %s192 = vtos %v191
    %v193 = vstv %s192
    %v194 = vadd.f32 %v176, %v193
    %195 = vst.msk [vmem:[#allocation4] sm:$0x1] %vm174, %v194
    // Predicated region
    $region18: #{tpu_custom_call.1} parent=1 // pred_check
      _
    $region19: #{tpu_custom_call.1} parent=1 // pred_check_branch
      %197 = sbr.rel (0) target = $region21
    $region20: #{tpu_custom_call.1} parent=1 // pred_region
      %199 = vsyncadd [#allocation3], 0
      %s201 = sshll.u32 [#allocation2], 4
      %s202 = int_to_ptr.vmem [resolvable:$true] %s201
      %s203 = sshll.u32 %s3, 4
      %s204 = int_to_ptr.hbm [resolvable:$true] %s203
      %206 = dma.vmem_to_hbm [thread:$0]  %s202, 16, %s204, [#allocation3]
    $region21: #{tpu_custom_call.1} parent=1 // pred_fallthru
      _
    // Predicated region
    $region22: #{tpu_custom_call.1} parent=1 // pred_check
      _
    $region23: #{tpu_custom_call.1} parent=1 // pred_check_branch
      %208 = sbr.rel (0) target = $region25
    $region24: #{tpu_custom_call.1} parent=1 // pred_region
      %210 = vsyncadd [#allocation5], 0
      %s212 = sshll.u32 [#allocation4], 4
      %s213 = int_to_ptr.vmem [resolvable:$true] %s212
      %s214 = sshll.u32 %s4, 4
      %s215 = int_to_ptr.hbm [resolvable:$true] %s214
      %217 = dma.vmem_to_hbm [thread:$0]  %s213, 16, %s215, [#allocation5]
    $region25: #{tpu_custom_call.1} parent=1 // pred_fallthru
      _
    // Predicated region
    $region26: #{tpu_custom_call.1} parent=1 // pred_check
      _
    $region27: #{tpu_custom_call.1} parent=1 // pred_check_branch
      %219 = sbr.rel (0) target = $region29
    $region28: #{tpu_custom_call.1} parent=1 // pred_region
      %221 = dma.done [#allocation3], 16
    $region29: #{tpu_custom_call.1} parent=1 // pred_fallthru
      _
    // Predicated region
    $region30: #{tpu_custom_call.1} parent=1 // pred_check
      _
    $region31: #{tpu_custom_call.1} parent=1 // pred_check_branch
      %223 = sbr.rel (0) target = $region33
    $region32: #{tpu_custom_call.1} parent=1 // pred_region
      %225 = dma.done [#allocation5], 16
    $region33: #{tpu_custom_call.1} parent=1 // pred_fallthru
      _
    %226 = vsyncpa [#allocation3], 1
    %227 = vsyncpa [#allocation5], 1

</llo_original>
